<compile_context>
chip_gen: v6e
topology: v6e:2x2x1
jax: 0.10.0
libtpu: 0.0.40
codegen_flags: <defaults>
</compile_context>

<pallas_src>
import functools

import jax
import jax.numpy as jnp
from jax.experimental import pallas as pl
from jax.experimental.pallas import tpu as pltpu


# ----------------------------------- kernel -----------------------------------------
def _bn_epilogue(z, gamma, beta, o_ref, *, eps, act, inv_n):
    """BatchNorm1d (batch statistics) + optional activation on a resident (N, tn) z."""
    # Two-pass moments: numerically robust vs E[z^2] - E[z]^2 (z is already resident).
    mean = jnp.sum(z, axis=0, keepdims=True) * inv_n          # (1, tn)
    c = z - mean
    var = jnp.sum(c * c, axis=0, keepdims=True) * inv_n       # biased batch variance
    a = gamma * jax.lax.rsqrt(var + eps)                      # (1, tn)
    y = c * a + beta                                          # fused scale/shift sweep
    if act == "relu":
        y = jnp.maximum(y, 0.0)
    o_ref[...] = y.astype(o_ref.dtype)


def _linear_bn_kernel(x_ref, wt_ref, gamma_ref, beta_ref, o_ref, *scratch,
                      eps, act, inv_n, mxu_dtype, single_k):
    """One (C_out-tile j, K-tile k) grid step of fused Linear -> BN -> act."""
    # Hot path: MXU partial product for this K slab, fp32 accumulation.
    # x is cast to the MXU dtype in-kernel (no separate wrapper-side cast pass).
    part = jnp.dot(x_ref[...].astype(mxu_dtype),
                   wt_ref[...].astype(mxu_dtype),
                   preferred_element_type=jnp.float32)

    if single_k:
        # Full reduction in one step: feed the dot result straight into the epilogue.
        _bn_epilogue(part, gamma_ref[...], beta_ref[...], o_ref,
                     eps=eps, act=act, inv_n=inv_n)
    else:
        k = pl.program_id(1)
        # fp32 accumulator: the resident output block itself when the output is fp32,
        # otherwise a dedicated fp32 VMEM scratch.
        acc_ref = scratch[0] if scratch else o_ref

        @pl.when(k == 0)
        def _():  # initialize with the first partial product (no zero-init sweep)
            acc_ref[...] = part.astype(acc_ref.dtype)

        @pl.when(k > 0)
        def _():
            acc_ref[...] += part.astype(acc_ref.dtype)

        @pl.when(k == pl.num_programs(1) - 1)
        def _():
            z = acc_ref[...].astype(jnp.float32)
            _bn_epilogue(z, gamma_ref[...], beta_ref[...], o_ref,
                         eps=eps, act=act, inv_n=inv_n)


# --------------------------------- host helpers --------------------------------------
def _vmem_capacity_bytes(default=64 << 20):
    """Physical VMEM per TensorCore (conservative 64 MiB fallback == v7x)."""
    try:
        info = pltpu.get_tpu_info()
        cap = getattr(info, "vmem_capacity_bytes", None)
        if cap:
            return int(cap)
    except Exception:
        pass
    return default


def _largest_tile(dim, cap, align):
    """Full dim if it fits `cap`; else the largest multiple of `align` that divides
    `dim` and is <= cap.  NOTE: falls back to the full (un-tiled) dim if no aligned
    divisor exists — that may exceed the assumed budget; the raised compiler VMEM
    limit is the backstop in that rare case."""
    if dim <= cap:
        return dim
    t = (cap // align) * align
    while t >= align:
        if dim % t == 0:
            return t
        t -= align
    return dim


def prepare_linear_bn_params(weight, gamma, beta, *, mxu_dtype=jnp.bfloat16):
    """One-time parameter prep (hoisted out of the per-call path): transpose the
    PyTorch-layout (C_out, C_in) weight to the MXU-friendly (C_in, C_out) layout and
    cast it to the MXU input dtype; reshape gamma/beta to (1, C_out) fp32."""
    wt = jnp.asarray(weight).T.astype(mxu_dtype)
    g = jnp.asarray(gamma).reshape(1, -1).astype(jnp.float32)
    b = jnp.asarray(beta).reshape(1, -1).astype(jnp.float32)
    return wt, g, b


def linear_bn(x, wt, gamma2d, beta2d, *, eps=1e-5, act=None,
              mxu_dtype=jnp.bfloat16, out_dtype=None, vmem_budget_bytes=None):
    """Fused Linear(no bias) -> BatchNorm1d(batch stats) -> optional activation.

    x:       (N, C_in)      N is the full batch (BN statistics reduce over axis 0).
    wt:      (C_in, C_out)  pre-transposed weight from prepare_linear_bn_params().
    gamma2d: (1, C_out) fp32;  beta2d: (1, C_out) fp32.
    """
    N, K = x.shape
    Kw, C_out = wt.shape
    assert K == Kw, (K, Kw)
    assert gamma2d.shape == (1, C_out) and beta2d.shape == (1, C_out)
    out_dtype = jnp.dtype(out_dtype or x.dtype)
    mxu_dtype = jnp.dtype(mxu_dtype)

    # ---- generation-aware VMEM budget (v7x: 64 MiB/TC, v5e/v6e: 128 MiB) ----------
    cap_bytes = _vmem_capacity_bytes()
    if vmem_budget_bytes is None:
        vmem_budget_bytes = max(32 << 20, min(96 << 20, int(0.70 * cap_bytes)))

    itm = mxu_dtype.itemsize
    ito = out_dtype.itemsize
    acc_in_out = out_dtype == jnp.dtype(jnp.float32)

    # ---- channel ("parallel") tile candidates -------------------------------------
    # Guarantee >= 2 channel tiles when C_out >= 256 so both v7x TensorCores get work
    # (per review, this is a no-op on single-TC v5e/v6e).
    tn_cap = 512
    if C_out >= 256:
        tn_cap = min(tn_cap, max(128, ((C_out // 2) // 128) * 128))
    cands = []
    if C_out <= tn_cap:
        cands.append(C_out)                       # full-channel block (always legal)
    for t in range(tn_cap, 127, -128):
        if t < C_out and C_out % t == 0 and t not in cands:
            cands.append(t)
    if not cands:
        cands = [C_out]                           # fallback: un-tiled channels
    cands.sort(reverse=True)

    def _cost(tn, tk, x_item, n_buf):
        n_k = K // tk
        c = n_buf * N * tk * x_item               # x slab (pipelined buffers)
        c += n_buf * tk * tn * itm                # W^T tile
        c += 2 * N * tn * ito                     # output block (double buffered)
        if n_k > 1 and not acc_in_out:
            c += N * tn * 4                       # fp32 accumulator scratch
        c += 4 * tn * 4                           # gamma/beta tiles
        c += 3 * N * tn * 4                       # epilogue temporaries (c, c*c, y)
        return c

    # ---- pick tk first: strongly prefer the full-K reduction in one step ----------
    tn = None
    tk = K
    for t in cands:                               # largest tn whose full-K step fits
        if _cost(t, K, x.dtype.itemsize, 2) <= vmem_budget_bytes:
            tn, tk = t, K
            break
    if tn is None:
        # Fallback: tile K.  Smallest channel tile, largest 128-aligned K slab that
        # fits with 3-deep buffering on the streamed operands.
        tn = cands[-1]
        fixed = (2 * N * tn * ito + (0 if acc_in_out else N * tn * 4)
                 + 4 * tn * 4 + 3 * N * tn * 4)
        rem = max(vmem_budget_bytes - fixed, 0)
        per_tk = 3 * (N + tn) * itm
        tk = _largest_tile(K, max(128, rem // max(per_tk, 1)), 128)

    n_j = C_out // tn
    n_k = K // tk
    single_k = n_k == 1

    # Wrapper-side bf16 cast of x only pays when x is re-streamed multiple times
    # (K tiled AND multiple channel sweeps); otherwise stream native dtype once and
    # cast inside the kernel (saves a full un-fused HBM read+write pass).
    wrapper_cast = (not single_k) and (n_j > 1) and (x.dtype != mxu_dtype)
    x_in = x.astype(mxu_dtype) if wrapper_cast else x

    kernel = functools.partial(_linear_bn_kernel, eps=eps, act=act, inv_n=1.0 / N,
                               mxu_dtype=mxu_dtype, single_k=single_k)
    scratch_shapes = ([] if (single_k or acc_in_out)
                      else [pltpu.VMEM((N, tn), jnp.float32)])

    # Deeper pipelining on the streamed slabs only when K is actually tiled.
    stream_kw = {} if single_k else dict(pipeline_mode=pl.Buffered(3))
    in_specs = [
        pl.BlockSpec((N, tk), lambda j, k: (0, k), **stream_kw),     # x K-slab
        pl.BlockSpec((tk, tn), lambda j, k: (k, j), **stream_kw),    # W^T tile
        pl.BlockSpec((1, tn), lambda j, k: (0, j)),                  # gamma tile
        pl.BlockSpec((1, tn), lambda j, k: (0, j)),                  # beta tile
    ]

    vmem_limit = int(min(vmem_budget_bytes + (8 << 20), int(0.85 * cap_bytes)))

    return pl.pallas_call(
        kernel,
        out_shape=jax.ShapeDtypeStruct((N, C_out), out_dtype),
        grid_spec=pltpu.PrefetchScalarGridSpec(
            num_scalar_prefetch=0,
            grid=(n_j, n_k),                       # (channel tiles, K reduction)
            in_specs=in_specs,
            out_specs=pl.BlockSpec((N, tn), lambda j, k: (0, j)),  # resident across K
            scratch_shapes=scratch_shapes,
        ),
        compiler_params=pltpu.CompilerParams(
            # Channel axis shards across TensorCores (v7x megacore); K is the reduction.
            dimension_semantics=("parallel", "arbitrary"),
            vmem_limit_bytes=vmem_limit,
        ),
    )(x_in, wt, gamma2d, beta2d)


# ------------------------------- references -----------------------------------------
def _reference_fp32(x, weight, gamma, beta, eps=1e-5, act=None):
    z = jnp.dot(x.astype(jnp.float32), weight.astype(jnp.float32).T)
    mean = jnp.mean(z, axis=0, keepdims=True)
    var = jnp.mean((z - mean) ** 2, axis=0, keepdims=True)
    y = (z - mean) * jax.lax.rsqrt(var + eps) * gamma + beta
    if act == "relu":
        y = jnp.maximum(y, 0.0)
    return y


def _reference_same_mxu(x, wt, gamma, beta, eps=1e-5, act=None, mxu_dtype=jnp.bfloat16):
    # Same matmul-operand dtype as the kernel (bf16 operands, fp32 accumulation).
    z = jnp.dot(x.astype(mxu_dtype), wt.astype(mxu_dtype),
                preferred_element_type=jnp.float32)
    mean = jnp.mean(z, axis=0, keepdims=True)
    var = jnp.mean((z - mean) ** 2, axis=0, keepdims=True)
    y = (z - mean) * jax.lax.rsqrt(var + eps) * gamma + beta
    if act == "relu":
        y = jnp.maximum(y, 0.0)
    return y


if __name__ == "__main__":
    N, C_IN, C_OUT = 16, 256, 128

    key = jax.random.PRNGKey(0)
    kx, kw, kg, kb = jax.random.split(key, 4)

    x = jax.random.normal(kx, (N, C_IN), dtype=jnp.float32)
    # Deterministic synthetic parameters (shapes per nn.Linear / nn.BatchNorm1d).
    weight = jax.random.normal(kw, (C_OUT, C_IN), dtype=jnp.float32) * (1.0 / C_IN ** 0.5)
    gamma = 1.0 + 0.1 * jax.random.normal(kg, (C_OUT,), dtype=jnp.float32)
    beta = 0.1 * jax.random.normal(kb, (C_OUT,), dtype=jnp.float32)

    # One-time parameter prep (weight transpose + bf16 cast hoisted out of the call path).
    wt, g2, b2 = prepare_linear_bn_params(weight, gamma, beta, mxu_dtype=jnp.bfloat16)

    out = jax.block_until_ready(linear_bn(x, wt, g2, b2, act="relu"))
    assert out.shape == (N, C_OUT) and out.dtype == x.dtype

    # Tight check vs. a JAX reference that uses the same bf16 matmul operands.
    ref_same = _reference_same_mxu(x, wt, gamma, beta, act="relu")
    assert jnp.allclose(out, ref_same, atol=1e-3, rtol=1e-3), \
        "mismatch vs same-precision reference"

    # Semantics check vs. the full-fp32 PyTorch-equivalent math (bf16-MXU tolerance).
    ref_fp32 = _reference_fp32(x, weight, gamma, beta, act="relu")
    assert jnp.allclose(out, ref_fp32, atol=3e-2, rtol=3e-2), "mismatch vs fp32 reference"

    # bf16-output path (single-K fast path writes bf16 directly from the epilogue).
    out_bf16 = jax.block_until_ready(
        linear_bn(x.astype(jnp.bfloat16), wt, g2, b2, act="relu"))
    assert out_bf16.dtype == jnp.bfloat16
    assert jnp.allclose(out_bf16.astype(jnp.float32), ref_fp32, atol=6e-2, rtol=6e-2)

    print("KERNEL_OK")
</pallas_src>

<mosaic_0001>
module attributes {stable_mosaic.version = 11 : i64} {
  func.func @_linear_bn_kernel(%arg0: i32, %arg1: i32, %arg2: memref<16x256xf32, #tpu.memory_space<vmem>>, %arg3: memref<256x128xbf16, #tpu.memory_space<vmem>>, %arg4: memref<1x128xf32, #tpu.memory_space<vmem>>, %arg5: memref<1x128xf32, #tpu.memory_space<vmem>>, %arg6: memref<16x128xf32, #tpu.memory_space<vmem>>) attributes {dimension_semantics = [#tpu.dimension_semantics<parallel>, #tpu.dimension_semantics<arbitrary>], iteration_bounds = array<i64: 1, 1>, scalar_prefetch = 0 : i64, scratch_operands = 0 : i64, tpu.core_type = #tpu.core_type<tc>, window_params = [{transform_indices = @transform_0, window_bounds = array<i64: 16, 256>}, {transform_indices = @transform_1, window_bounds = array<i64: 256, 128>}, {transform_indices = @transform_2, window_bounds = array<i64: 1, 128>}, {transform_indices = @transform_3, window_bounds = array<i64: 1, 128>}, {transform_indices = @transform_4, window_bounds = array<i64: 16, 128>}]} {
    %c0 = arith.constant 0 : index
    %c0_0 = arith.constant 0 : index
    %0 = vector.load %arg2[%c0, %c0_0] : memref<16x256xf32, #tpu.memory_space<vmem>>, vector<16x256xf32>
    %1 = arith.truncf %0 : vector<16x256xf32> to vector<16x256xbf16>
    %c0_1 = arith.constant 0 : index
    %c0_2 = arith.constant 0 : index
    %2 = vector.load %arg3[%c0_1, %c0_2] : memref<256x128xbf16, #tpu.memory_space<vmem>>, vector<256x128xbf16>
    %cst = arith.constant dense<0.000000e+00> : vector<16x128xf32>
    %3 = tpu.matmul %1, %2, %cst {dimension_numbers = #tpu.dot_dimension_numbers<[1], [0], [0], [1], [0, 0, 1, 1], [], []>} : vector<16x256xbf16>, vector<256x128xbf16>, vector<16x128xf32> -> vector<16x128xf32>
    %c0_3 = arith.constant 0 : index
    %c0_4 = arith.constant 0 : index
    %4 = vector.load %arg4[%c0_3, %c0_4] : memref<1x128xf32, #tpu.memory_space<vmem>>, vector<1x128xf32>
    %c0_5 = arith.constant 0 : index
    %c0_6 = arith.constant 0 : index
    %5 = vector.load %arg5[%c0_5, %c0_6] : memref<1x128xf32, #tpu.memory_space<vmem>>, vector<1x128xf32>
    %cst_7 = arith.constant dense<0.000000e+00> : vector<128xf32>
    %6 = vector.multi_reduction <add>, %3, %cst_7 [0] : vector<16x128xf32> to vector<128xf32>
    %7 = vector.shape_cast %6 : vector<128xf32> to vector<1x128xf32>
    %cst_8 = arith.constant 6.250000e-02 : f32
    %8 = vector.broadcast %cst_8 : f32 to vector<1x128xf32>
    %9 = arith.mulf %7, %8 : vector<1x128xf32>
    %10 = vector.broadcast %9 : vector<1x128xf32> to vector<16x128xf32>
    %11 = arith.subf %3, %10 : vector<16x128xf32>
    %12 = arith.mulf %11, %11 : vector<16x128xf32>
    %cst_9 = arith.constant dense<0.000000e+00> : vector<128xf32>
    %13 = vector.multi_reduction <add>, %12, %cst_9 [0] : vector<16x128xf32> to vector<128xf32>
    %14 = vector.shape_cast %13 : vector<128xf32> to vector<1x128xf32>
    %cst_10 = arith.constant 6.250000e-02 : f32
    %15 = vector.broadcast %cst_10 : f32 to vector<1x128xf32>
    %16 = arith.mulf %14, %15 : vector<1x128xf32>
    %cst_11 = arith.constant 9.99999974E-6 : f32
    %17 = vector.broadcast %cst_11 : f32 to vector<1x128xf32>
    %18 = arith.addf %16, %17 : vector<1x128xf32>
    %19 = math.rsqrt %18 : vector<1x128xf32>
    %20 = arith.mulf %4, %19 : vector<1x128xf32>
    %21 = vector.broadcast %20 : vector<1x128xf32> to vector<16x128xf32>
    %22 = arith.mulf %11, %21 : vector<16x128xf32>
    %23 = vector.broadcast %5 : vector<1x128xf32> to vector<16x128xf32>
    %24 = arith.addf %22, %23 : vector<16x128xf32>
    %cst_12 = arith.constant 0.000000e+00 : f32
    %25 = vector.broadcast %cst_12 : f32 to vector<16x128xf32>
    %26 = arith.maximumf %24, %25 : vector<16x128xf32>
    %c0_13 = arith.constant 0 : index
    %c0_14 = arith.constant 0 : index
    %27 = vector.load %arg6[%c0_13, %c0_14] : memref<16x128xf32, #tpu.memory_space<vmem>>, vector<16x128xf32>
    tpu.vector_store %arg6[%c0_13, %c0_14], %26 {strides = array<i32>} : memref<16x128xf32, #tpu.memory_space<vmem>>, vector<16x128xf32>,
    return
  }
  func.func @transform_0(%arg0: i32, %arg1: i32) -> (i32, i32) {
    %c0_i32 = arith.constant 0 : i32
    %c0_i32_0 = arith.constant 0 : i32
    return %c0_i32, %arg1 : i32, i32
  }
  func.func @transform_1(%arg0: i32, %arg1: i32) -> (i32, i32) {
    %c0_i32 = arith.constant 0 : i32
    return %arg1, %arg0 : i32, i32
  }
  func.func @transform_2(%arg0: i32, %arg1: i32) -> (i32, i32) {
    %c0_i32 = arith.constant 0 : i32
    %c0_i32_0 = arith.constant 0 : i32
    return %c0_i32, %arg0 : i32, i32
  }
  func.func @transform_3(%arg0: i32, %arg1: i32) -> (i32, i32) {
    %c0_i32 = arith.constant 0 : i32
    %c0_i32_0 = arith.constant 0 : i32
    return %c0_i32, %arg0 : i32, i32
  }
  func.func @transform_4(%arg0: i32, %arg1: i32) -> (i32, i32) {
    %c0_i32 = arith.constant 0 : i32
    %c0_i32_0 = arith.constant 0 : i32
    return %c0_i32, %arg0 : i32, i32
  }
}

</mosaic_0001>

<llo_original>
// kernel: tpu_custom_call.1
$region0: #{tpu_custom_call.1}
  #allocation0 [shape = 'u32[]', space=smem, size = 0x4, offset = 0x4, fixed_abs, tag = 'smem constant byte address 0x4 - core index']
  #allocation1 [shape = 'u32[144,128]{1,0:T(1,128)}', space=vmem, size = 0x12000, scoped, tag = 'internal scratch']
  %s0 = inlined_call_operand.hbm [shape: f32[16,256], index: 0, kind: input, shape index: {}]
  %s1 = inlined_call_operand.hbm [shape: bf16[256,128], index: 1, kind: input, shape index: {}]
  %s2 = inlined_call_operand.vmem [shape: f32[1,128], index: 2, kind: input, shape index: {}]
  %s3 = inlined_call_operand.vmem [shape: f32[1,128], index: 3, kind: input, shape index: {}]
  %s4 = inlined_call_operand.hbm [shape: f32[16,128], index: 4, kind: output, shape index: {}]
  %s5 = sld [smem:[#allocation0]]
  $region34: #{tpu_custom_call.1} parent=0
    _
  %s7 = ssub.s32 1, %s5
  %s8 = scalar_select 0, %s7, %s5
  $region1: #{tpu_custom_call.1} parent=0
    #allocation2 [shape = 'u8[16384]{0}', space=vmem, size = 0x4000, scoped, tag = 'input window, operand 0, single buffered']
    #allocation3 [shape = 's32[1]{0}', space=sflag, size = 0x4, scoped, tag = 'scoped memory for tpu_custom_call.1']
    #allocation4 [shape = 's32[1]{0}', space=sflag, size = 0x4, scoped, tag = 'scoped memory for tpu_custom_call.1']
    #allocation5 [shape = 'u8[65536]{0}', space=vmem, size = 0x10000, scoped, tag = 'input window, operand 1, single buffered']
    #allocation6 [shape = 's32[1]{0}', space=sflag, size = 0x4, scoped, tag = 'scoped memory for tpu_custom_call.1']
    #allocation7 [shape = 'u8[8192]{0}', space=vmem, size = 0x2000, scoped, tag = 'output window, operand 0, single buffered']
    %9 = vsyncpa [#allocation3], 0
    %10 = vsyncpa [#allocation6], 0
    %11 = vsyncpa [#allocation4], 0
    // Predicated region
    $region2: #{tpu_custom_call.1} parent=1 // pred_check
      _
    $region3: #{tpu_custom_call.1} parent=1 // pred_check_branch
      %13 = sbr.rel (0) target = $region5
    $region4: #{tpu_custom_call.1} parent=1 // pred_region
      %s15 = ssub.s32 512, 512
      %16 = vsyncadd [#allocation3], %s15
      %s17 = sshll.u32 [#allocation2], 4
      %s18 = int_to_ptr.vmem [resolvable:$true] %s17
      %23 = dma.hbm_to_vmem [thread:$0]  %s0, 512, %s18, [#allocation3], 256, 256, 16
    $region5: #{tpu_custom_call.1} parent=1 // pred_fallthru
      _
    // Predicated region
    $region6: #{tpu_custom_call.1} parent=1 // pred_check
      _
    $region7: #{tpu_custom_call.1} parent=1 // pred_check_branch
      %25 = sbr.rel (0) target = $region9
    $region8: #{tpu_custom_call.1} parent=1 // pred_region
      %s27 = ssub.s32 2048, 2048
      %28 = vsyncadd [#allocation6], %s27
      %s29 = sshll.u32 [#allocation5], 4
      %s30 = int_to_ptr.vmem [resolvable:$true] %s29
      %35 = dma.hbm_to_vmem [thread:$0]  %s1, 2048, %s30, [#allocation6], 64, 64, 4
    $region9: #{tpu_custom_call.1} parent=1 // pred_fallthru
      _
    // Predicated region
    $region10: #{tpu_custom_call.1} parent=1 // pred_check
      _
    $region11: #{tpu_custom_call.1} parent=1 // pred_check_branch
      %37 = sbr.rel (0) target = $region13
    $region12: #{tpu_custom_call.1} parent=1 // pred_region
      _
    $region13: #{tpu_custom_call.1} parent=1 // pred_fallthru
      _
    // Predicated region
    $region14: #{tpu_custom_call.1} parent=1 // pred_check
      _
    $region15: #{tpu_custom_call.1} parent=1 // pred_check_branch
      %39 = sbr.rel (0) target = $region17
    $region16: #{tpu_custom_call.1} parent=1 // pred_region
      _
    $region17: #{tpu_custom_call.1} parent=1 // pred_fallthru
      _
    // Predicated region
    $region18: #{tpu_custom_call.1} parent=1 // pred_check
      _
    $region19: #{tpu_custom_call.1} parent=1 // pred_check_branch
      %41 = sbr.rel (0) target = $region21
    $region20: #{tpu_custom_call.1} parent=1 // pred_region
      %42 = dma.done [#allocation3], 512
    $region21: #{tpu_custom_call.1} parent=1 // pred_fallthru
      _
    // Predicated region
    $region22: #{tpu_custom_call.1} parent=1 // pred_check
      _
    $region23: #{tpu_custom_call.1} parent=1 // pred_check_branch
      %44 = sbr.rel (0) target = $region25
    $region24: #{tpu_custom_call.1} parent=1 // pred_region
      %45 = dma.done [#allocation6], 2048
    $region25: #{tpu_custom_call.1} parent=1 // pred_fallthru
      _
    %v47 = vld [vmem:[#allocation2] sm:$0xff]
    %v48 = vld [vmem:[#allocation2 + $0x8] sm:$0xff]
    %v49 = vld [vmem:[#allocation2 + $0x10] sm:$0xff]
    %v50 = vld [vmem:[#allocation2 + $0x18] sm:$0xff]
    %v51 = vpack.c.bf16 %v49, %v47
    %v52 = vpack.c.bf16 %v50, %v48
    %v53 = vld [vmem:[#allocation5] sm:$0xf]
    %v54 = vld [vmem:[#allocation5 + $0x4] sm:$0xf]
    %v55 = vld [vmem:[#allocation5 + $0x8] sm:$0xf]
    %v56 = vld [vmem:[#allocation5 + $0xc] sm:$0xf]
    %v57 = vld [vmem:[#allocation5 + $0x10] sm:$0xf]
    %v58 = vld [vmem:[#allocation5 + $0x14] sm:$0xf]
    %v59 = vld [vmem:[#allocation5 + $0x18] sm:$0xf]
    %v60 = vld [vmem:[#allocation5 + $0x1c] sm:$0xf]
    %v61 = vld [vmem:[#allocation5 + $0x20] sm:$0xf]
    %v62 = vld [vmem:[#allocation5 + $0x24] sm:$0xf]
    %v63 = vld [vmem:[#allocation5 + $0x28] sm:$0xf]
    %v64 = vld [vmem:[#allocation5 + $0x2c] sm:$0xf]
    %v65 = vld [vmem:[#allocation5 + $0x30] sm:$0xf]
    %v66 = vld [vmem:[#allocation5 + $0x34] sm:$0xf]
    %v67 = vld [vmem:[#allocation5 + $0x38] sm:$0xf]
    %v68 = vld [vmem:[#allocation5 + $0x3c] sm:$0xf]
    %v69 = vld [vmem:[#allocation5 + $0x40] sm:$0xf]
    %v70 = vld [vmem:[#allocation5 + $0x44] sm:$0xf]
    %v71 = vld [vmem:[#allocation5 + $0x48] sm:$0xf]
    %v72 = vld [vmem:[#allocation5 + $0x4c] sm:$0xf]
    %v73 = vld [vmem:[#allocation5 + $0x50] sm:$0xf]
    %v74 = vld [vmem:[#allocation5 + $0x54] sm:$0xf]
    %v75 = vld [vmem:[#allocation5 + $0x58] sm:$0xf]
    %v76 = vld [vmem:[#allocation5 + $0x5c] sm:$0xf]
    %v77 = vld [vmem:[#allocation5 + $0x60] sm:$0xf]
    %v78 = vld [vmem:[#allocation5 + $0x64] sm:$0xf]
    %v79 = vld [vmem:[#allocation5 + $0x68] sm:$0xf]
    %v80 = vld [vmem:[#allocation5 + $0x6c] sm:$0xf]
    %v81 = vld [vmem:[#allocation5 + $0x70] sm:$0xf]
    %v82 = vld [vmem:[#allocation5 + $0x74] sm:$0xf]
    %v83 = vld [vmem:[#allocation5 + $0x78] sm:$0xf]
    %v84 = vld [vmem:[#allocation5 + $0x7c] sm:$0xf]
    %v117 = vunpack.c.l.b16 %v53
    %v118 = vunpack.c.l.b16 %v54
    %v119 = vunpack.c.l.b16 %v55
    %v120 = vunpack.c.l.b16 %v56
    %v121 = vunpack.c.l.b16 %v57
    %v122 = vunpack.c.l.b16 %v58
    %v123 = vunpack.c.l.b16 %v59
    %v124 = vunpack.c.l.b16 %v60
    %v125 = vunpack.c.l.b16 %v61
    %v126 = vunpack.c.l.b16 %v62
    %v127 = vunpack.c.l.b16 %v63
    %v128 = vunpack.c.l.b16 %v64
    %v129 = vunpack.c.l.b16 %v65
    %v130 = vunpack.c.l.b16 %v66
    %v131 = vunpack.c.l.b16 %v67
    %v132 = vunpack.c.l.b16 %v68
    %v133 = vunpack.c.l.b16 %v69
    %v134 = vunpack.c.l.b16 %v70
    %v135 = vunpack.c.l.b16 %v71
    %v136 = vunpack.c.l.b16 %v72
    %v137 = vunpack.c.l.b16 %v73
    %v138 = vunpack.c.l.b16 %v74
    %v139 = vunpack.c.l.b16 %v75
    %v140 = vunpack.c.l.b16 %v76
    %v141 = vunpack.c.l.b16 %v77
    %v142 = vunpack.c.l.b16 %v78
    %v143 = vunpack.c.l.b16 %v79
    %v144 = vunpack.c.l.b16 %v80
    %v145 = vunpack.c.l.b16 %v81
    %v146 = vunpack.c.l.b16 %v82
    %v147 = vunpack.c.l.b16 %v83
    %v148 = vunpack.c.l.b16 %v84
    %v149 = vpack.c.b16 %v118, %v117
    %v150 = vpack.c.b16 %v120, %v119
    %v151 = vpack.c.b16 %v122, %v121
    %v152 = vpack.c.b16 %v124, %v123
    %v153 = vpack.c.b16 %v126, %v125
    %v154 = vpack.c.b16 %v128, %v127
    %v155 = vpack.c.b16 %v130, %v129
    %v156 = vpack.c.b16 %v132, %v131
    %v157 = vpack.c.b16 %v134, %v133
    %v158 = vpack.c.b16 %v136, %v135
    %v159 = vpack.c.b16 %v138, %v137
    %v160 = vpack.c.b16 %v140, %v139
    %v161 = vpack.c.b16 %v142, %v141
    %v162 = vpack.c.b16 %v144, %v143
    %v163 = vpack.c.b16 %v146, %v145
    %v164 = vpack.c.b16 %v148, %v147
    %181 = vmatprep.subr.bf16.mxu0 0
    %182 = vmatpush1.bf16.msra.mxu0 %v156
    %183 = vmatprep.subr.bf16.mxu0 0
    %184 = vmatpush1.bf16.msra.mxu0 %v155
    %185 = vmatprep.subr.bf16.mxu0 0
    %186 = vmatpush1.bf16.msra.mxu0 %v154
    %187 = vmatprep.subr.bf16.mxu0 0
    %188 = vmatpush1.bf16.msra.mxu0 %v153
    %189 = vmatprep.subr.bf16.mxu0 0
    %190 = vmatpush1.bf16.msra.mxu0 %v152
    %191 = vmatprep.subr.bf16.mxu0 0
    %192 = vmatpush1.bf16.msra.mxu0 %v151
    %193 = vmatprep.subr.bf16.mxu0 0
    %194 = vmatpush1.bf16.msra.mxu0 %v150
    %195 = vmatprep.subr.bf16.mxu0 0
    %196 = vmatpush1.bf16.msra.mxu0 %v149
    %197 = vmatprep.subr.bf16.mxu0 0
    %198 = vmatpush2.bf16.msra.mxu0 %v164
    %199 = vmatprep.subr.bf16.mxu0 0
    %200 = vmatpush2.bf16.msra.mxu0 %v163
    %201 = vmatprep.subr.bf16.mxu0 0
    %202 = vmatpush2.bf16.msra.mxu0 %v162
    %203 = vmatprep.subr.bf16.mxu0 0
    %204 = vmatpush2.bf16.msra.mxu0 %v161
    %205 = vmatprep.subr.bf16.mxu0 0
    %206 = vmatpush2.bf16.msra.mxu0 %v160
    %207 = vmatprep.subr.bf16.mxu0 0
    %208 = vmatpush2.bf16.msra.mxu0 %v159
    %209 = vmatprep.subr.bf16.mxu0 0
    %210 = vmatpush2.bf16.msra.mxu0 %v158
    %211 = vmatprep.subr.bf16.mxu0 0
    %212 = vmatpush2.bf16.msra.mxu0 %v157
    %213 = vmatprep.mubr.bf16.mxu0 %v52
    %214 = vmatmul.mubr.bf16.gmra.mxu0 %v51
    %v215 = vpop.f32.mrf.mxu0
    %v216 = vadd.f32 0.0, %v215
    %v217 = vpop.f32.mrf.mxu0
    %v218 = vpop.f32.mrf.mxu0
    %v219 = vadd.f32 0.0, %v218
    %v220 = vpop.f32.mrf.mxu0
    %221 = vdwg.mxu0
    %v222 = vld [vmem:[%s2] sm:$0x1]
    %v223 = vld [vmem:[%s3] sm:$0x1]
    %v224 = vadd.f32 %v216, %v219
    %v225 = vrot.slane %v224, 4
    %v226 = vadd.f32 %v224, %v225
    %v227 = vrot.slane %v226, 2
    %v228 = vadd.f32 %v226, %v227
    %v229 = vrot.slane %v228, 1
    %v230 = vadd.f32 %v228, %v229
    %v231 = vmul.f32 %v230, 0.0625
    %v232 = vsub.f32 %v216, %v231
    %v233 = vsub.f32 %v219, %v231
    %v234 = vmul.f32 %v232, %v232
    %v235 = vmul.f32 %v233, %v233
    %v236 = vadd.f32 %v234, %v235
    %v237 = vrot.slane %v236, 4
    %v238 = vadd.f32 %v236, %v237
    %v239 = vrot.slane %v238, 2
    %v240 = vadd.f32 %v238, %v239
    %v241 = vrot.slane %v240, 1
    %v242 = vadd.f32 %v240, %v241
    %v243 = vmul.f32 %v242, 0.0625
    %v244 = vadd.f32 %v243, 1e-05
    %v245 = vrsqrt.pop %v244
    %v246 = vmul.f32 %v222, %v245
    %v248 = vlaneseq
    %v249 = vshrl.u32 %v248, 7
    %v250 = vsub.s32 0, %v249
    %v251 = vrot.slane %v246, %v250
    %v253 = vmul.f32 %v232, %v251
    %v254 = vmul.f32 %v233, %v251
    %v256 = vlaneseq
    %v257 = vshrl.u32 %v256, 7
    %v258 = vsub.s32 0, %v257
    %v259 = vrot.slane %v223, %v258
    %v261 = vadd.f32 %v253, %v259
    %v262 = vadd.f32 %v254, %v259
    %v263 = vmax.f32 %v261, 0.0
    %v264 = vmax.f32 %v262, 0.0
    %265 = vst [vmem:[#allocation7] sm:$0xff] %v263
    %266 = vst [vmem:[#allocation7 + $0x8] sm:$0xff] %v264
    // Predicated region
    $region26: #{tpu_custom_call.1} parent=1 // pred_check
      _
    $region27: #{tpu_custom_call.1} parent=1 // pred_check_branch
      %268 = sbr.rel (0) target = $region29
    $region28: #{tpu_custom_call.1} parent=1 // pred_region
      %s270 = ssub.s32 256, 256
      %271 = vsyncadd [#allocation4], %s270
      %s272 = sshll.u32 [#allocation7], 4
      %s273 = int_to_ptr.vmem [resolvable:$true] %s272
      %278 = dma.vmem_to_hbm [thread:$0]  %s273, 256, %s4, [#allocation4], 128, 128, 8
    $region29: #{tpu_custom_call.1} parent=1 // pred_fallthru
      _
    // Predicated region
    $region30: #{tpu_custom_call.1} parent=1 // pred_check
      _
    $region31: #{tpu_custom_call.1} parent=1 // pred_check_branch
      %280 = sbr.rel (0) target = $region33
    $region32: #{tpu_custom_call.1} parent=1 // pred_region
      %281 = dma.done [#allocation4], 256
    $region33: #{tpu_custom_call.1} parent=1 // pred_fallthru
      _
    %282 = vsyncpa [#allocation3], 1
    %283 = vsyncpa [#allocation6], 1
    %284 = vsyncpa [#allocation4], 1

</llo_original>
